<compile_context>
chip_gen: v5e
topology: v5e:2x2
jax: 0.10.0
libtpu: 0.0.40
codegen_flags: <defaults>
</compile_context>

<pallas_src>
import jax
import jax.numpy as jnp
from jax.experimental import pallas as pl
from jax.experimental.pallas import tpu as pltpu
from jax.scipy.linalg import block_diag

P = 128        # lane width of the packed parameter buffer
TILE_B = 2048  # default batch rows per grid step (clamped per call)
ALIGN = 16     # section row alignment (multiple of f32(8) and bf16(16) sublane tiles)


def _round_up(x, m):
    return (x + m - 1) // m * m


def _choose_tile(B, tile_b):
    """Clamp the batch tile to the batch and ensure >=2 tiles for v7x's 2 TCs."""
    tile_b = max(8, min(tile_b, _round_up(B, 8)))
    if B >= 16 and pl.cdiv(B, tile_b) < 2:
        tile_b = max(8, _round_up(pl.cdiv(B, 2), 8))
    return tile_b


# ----------------------------- Pallas kernel --------------------------------
def make_kernel(layout, compute_dtype):
    """layout: static tuple of (w_row_off, k_nat, n_nat, b_row_off) per layer."""
    def kernel(x_ref, params_ref, o_ref):
        z = x_ref[...].astype(jnp.float32)                     # (TB, input_dim)
        for w_off, k, n, b_off in layout:                      # 6 fused dense+ReLU layers
            w = params_ref[w_off:w_off + k, 0:n]               # (k, n) natural-size weight
            bias = params_ref[b_off:b_off + 1, 0:n].astype(jnp.float32)   # (1, n)
            acc = jnp.dot(z.astype(compute_dtype), w,
                          preferred_element_type=jnp.float32)  # (TB, n) f32 accumulate
            z = jnp.maximum(acc + bias, 0.0)                   # ReLU (incl. after last layer)
        o_ref[...] = z.astype(o_ref.dtype)                     # narrow (TB, out_dim) store
    return kernel


# --------------------------- parameter packing --------------------------------
def pack_params(fused_params, dtype=jnp.float32):
    """Pack 6 layers of (W (in,out), b (out,)) into one (R, P) buffer of `dtype`.

    Each weight section keeps its NATURAL K rows (allocation rounded to ALIGN for
    aligned sub-slices); lanes are zero-padded to P=128 because all sections share
    the buffer's lane width.  The kernel slices exactly (k_nat, n_nat), so no padded
    element ever reaches the MXU.  Returns (packed, layout) with
    layout = ((w_off, k_nat, n_nat, b_off), ...).
    """
    rows, layout, off = [], [], 0
    for w, b in fused_params:
        k, n = w.shape
        assert k <= P and n <= P, "width > 128 lanes unsupported by this packing"
        k_alloc = _round_up(k, ALIGN)
        w_pad = jnp.zeros((k_alloc, P), dtype).at[:k, :n].set(w.astype(dtype))
        b_pad = jnp.zeros((ALIGN, P), dtype).at[0, :n].set(b.reshape(-1).astype(dtype))
        layout.append((off, k, n, off + k_alloc))
        rows += [w_pad, b_pad]
        off += k_alloc + ALIGN
    return jnp.concatenate(rows, axis=0), tuple(layout)


# ------------------------------- wrapper -------------------------------------
def local_notion_forward(x, fused_params, *, tile_b=TILE_B, use_bf16=False):
    """x: (B, input_dim) or (input_dim,) f32.  Returns (B, out_dim) / (out_dim,)."""
    single = (x.ndim == 1)
    if single:
        x = x[None, :]
    B, input_dim = x.shape
    out_dim = fused_params[-1][0].shape[1]

    compute_dtype = jnp.bfloat16 if use_bf16 else jnp.float32
    packed, layout = pack_params(fused_params, compute_dtype)

    tb = _choose_tile(B, tile_b)
    grid = (pl.cdiv(B, tb),)           # ragged last tile handled by Pallas (no wrapper pad)
    xf = x.astype(jnp.float32)

    out = pl.pallas_call(
        make_kernel(layout, compute_dtype),
        out_shape=jax.ShapeDtypeStruct((B, out_dim), jnp.float32),
        grid=grid,
        in_specs=[
            pl.BlockSpec((tb, input_dim), lambda i: (i, 0)),   # stream batch tiles of X
            pl.BlockSpec(packed.shape, lambda i: (0, 0)),      # params: constant index -> VMEM-resident
        ],
        out_specs=pl.BlockSpec((tb, out_dim), lambda i: (i, 0)),  # narrow writeback (32x less HBM)
        compiler_params=pltpu.CompilerParams(
            dimension_semantics=("parallel",)),                # batch axis split across TCs (v7x)
    )(xf, packed)

    return out[0] if single else out


# ------------------------- parameter construction ----------------------------
def _linear_params(key, fan_in, fan_out):
    """PyTorch nn.Linear default init: U(-1/sqrt(fan_in), 1/sqrt(fan_in))."""
    kw, kb = jax.random.split(key)
    bound = 1.0 / (fan_in ** 0.5)
    w = jax.random.uniform(kw, (fan_out, fan_in), minval=-bound, maxval=bound,
                           dtype=jnp.float32)
    b = jax.random.uniform(kb, (fan_out,), minval=-bound, maxval=bound,
                           dtype=jnp.float32)
    return w, b


def init_params(key, input_dim, output_dim):
    nb = input_dim // 2
    keys = iter(jax.random.split(key, 2 * nb + 4))
    blocks = []
    for _ in range(nb):
        w1, b1 = _linear_params(next(keys), 2, 2)   # Block.layer1
        w2, b2 = _linear_params(next(keys), 2, 4)   # Block.layer2
        blocks.append((w1, b1, w2, b2))
    net = []
    for fan_in, fan_out in [(4 * nb, 32), (32, 16), (16, 16), (16, output_dim)]:
        net.append(_linear_params(next(keys), fan_in, fan_out))
    return blocks, net


def fuse_params(blocks, net):
    """Turn the per-block tiny MLPs into two block-diagonal dense layers."""
    W1 = block_diag(*[w1 for w1, _, _, _ in blocks])        # (2nb, 2nb)
    B1 = jnp.concatenate([b1 for _, b1, _, _ in blocks])    # (2nb,)
    W2 = block_diag(*[w2 for _, _, w2, _ in blocks])        # (4nb, 2nb)
    B2 = jnp.concatenate([b2 for _, _, _, b2 in blocks])    # (4nb,)
    fused = [(W1.T, B1), (W2.T, B2)]
    fused += [(w.T, b) for w, b in net]                     # (in, out), (out,)
    return fused


# --------------------------- pure-JAX reference ------------------------------
def reference_forward(x, blocks, net):
    hp = jax.lax.Precision.HIGHEST
    outs = []
    for b, (w1, b1, w2, b2) in enumerate(blocks):
        xb = x[2 * b:2 * b + 2]
        z = jnp.maximum(jnp.dot(w1, xb, precision=hp) + b1, 0.0)
        z = jnp.maximum(jnp.dot(w2, z, precision=hp) + b2, 0.0)
        outs.append(z)
    z = jnp.concatenate(outs)          # == torch.cat(out)
    for w, b in net:
        z = jnp.maximum(jnp.dot(w, z, precision=hp) + b, 0.0)
    return z


# ---------------------------------- main --------------------------------------
if __name__ == "__main__":
    input_dim, output_dim = 8, 4
    key = jax.random.PRNGKey(0)
    kp, kx1, kx2, kx3, kx4 = jax.random.split(key, 5)

    blocks, net = init_params(kp, input_dim, output_dim)
    fused = fuse_params(blocks, net)
    ref_batched = jax.vmap(lambda v: reference_forward(v, blocks, net))

    # 1) f32 kernel, tile-divisible and ragged batches.
    for batch, kk in ((512, kx1), (300, kx2)):
        X = jax.random.normal(kk, (batch, input_dim), dtype=jnp.float32)
        out = jax.block_until_ready(local_notion_forward(X, fused))
        ref = ref_batched(X)
        assert out.shape == (batch, output_dim), out.shape
        assert jnp.allclose(out, ref, atol=1e-4, rtol=1e-4), (out[:2], ref[:2])

    # 2) original single-vector semantics (x of shape (input_dim,)).
    x1 = jax.random.normal(kx3, (input_dim,), dtype=jnp.float32)
    out1 = jax.block_until_ready(local_notion_forward(x1, fused))
    ref1 = reference_forward(x1, blocks, net)
    assert out1.shape == (output_dim,), out1.shape
    assert jnp.allclose(out1, ref1, atol=1e-4, rtol=1e-4), (out1, ref1)

    # 3) bf16 operand path (v6e/v7x MXU-native); looser parity tolerance.
    Xb = jax.random.normal(kx4, (512, input_dim), dtype=jnp.float32)
    outb = jax.block_until_ready(local_notion_forward(Xb, fused, use_bf16=True))
    refb = ref_batched(Xb)
    assert outb.shape == (512, output_dim), outb.shape
    assert jnp.allclose(outb, refb, atol=1e-1, rtol=1e-1), (outb[:2], refb[:2])

    print("KERNEL_OK")
</pallas_src>

<mosaic_0001>
module attributes {stable_mosaic.version = 11 : i64} {
  func.func @kernel(%arg0: i32, %arg1: memref<256x8xf32, #tpu.memory_space<vmem>>, %arg2: memref<208x128xf32, #tpu.memory_space<vmem>>, %arg3: memref<256x4xf32, #tpu.memory_space<vmem>>) attributes {dimension_semantics = [#tpu.dimension_semantics<parallel>], iteration_bounds = array<i64: 2>, scalar_prefetch = 0 : i64, scratch_operands = 0 : i64, tpu.core_type = #tpu.core_type<tc>, window_params = [{transform_indices = @transform_0, window_bounds = array<i64: 256, 8>}, {pipeline_mode = #tpu.pipeline_mode<synchronous>, transform_indices = @transform_1, window_bounds = array<i64: 208, 128>}, {transform_indices = @transform_2, window_bounds = array<i64: 256, 4>}]} {
    %c0 = arith.constant 0 : index
    %c0_0 = arith.constant 0 : index
    %0 = vector.load %arg1[%c0, %c0_0] : memref<256x8xf32, #tpu.memory_space<vmem>>, vector<256x8xf32>
    %c0_1 = arith.constant 0 : index
    %c0_2 = arith.constant 0 : index
    %1 = vector.load %arg2[%c0_1, %c0_2] : memref<208x128xf32, #tpu.memory_space<vmem>>, vector<8x8xf32>
    %c16 = arith.constant 16 : index
    %c0_3 = arith.constant 0 : index
    %2 = vector.load %arg2[%c16, %c0_3] : memref<208x128xf32, #tpu.memory_space<vmem>>, vector<1x8xf32>
    %cst = arith.constant dense<0.000000e+00> : vector<256x8xf32>
    %3 = tpu.matmul %0, %1, %cst {dimension_numbers = #tpu.dot_dimension_numbers<[1], [0], [0], [1], [0, 0, 1, 1], [], []>} : vector<256x8xf32>, vector<8x8xf32>, vector<256x8xf32> -> vector<256x8xf32>
    %4 = vector.broadcast %2 : vector<1x8xf32> to vector<256x8xf32>
    %5 = arith.addf %3, %4 : vector<256x8xf32>
    %cst_4 = arith.constant 0.000000e+00 : f32
    %6 = vector.broadcast %cst_4 : f32 to vector<256x8xf32>
    %7 = arith.maximumf %5, %6 : vector<256x8xf32>
    %c32 = arith.constant 32 : index
    %c0_5 = arith.constant 0 : index
    %8 = vector.load %arg2[%c32, %c0_5] : memref<208x128xf32, #tpu.memory_space<vmem>>, vector<8x16xf32>
    %c48 = arith.constant 48 : index
    %c0_6 = arith.constant 0 : index
    %9 = vector.load %arg2[%c48, %c0_6] : memref<208x128xf32, #tpu.memory_space<vmem>>, vector<1x16xf32>
    %cst_7 = arith.constant dense<0.000000e+00> : vector<256x16xf32>
    %10 = tpu.matmul %7, %8, %cst_7 {dimension_numbers = #tpu.dot_dimension_numbers<[1], [0], [0], [1], [0, 0, 1, 1], [], []>} : vector<256x8xf32>, vector<8x16xf32>, vector<256x16xf32> -> vector<256x16xf32>
    %11 = vector.broadcast %9 : vector<1x16xf32> to vector<256x16xf32>
    %12 = arith.addf %10, %11 : vector<256x16xf32>
    %cst_8 = arith.constant 0.000000e+00 : f32
    %13 = vector.broadcast %cst_8 : f32 to vector<256x16xf32>
    %14 = arith.maximumf %12, %13 : vector<256x16xf32>
    %c64 = arith.constant 64 : index
    %c0_9 = arith.constant 0 : index
    %15 = vector.load %arg2[%c64, %c0_9] : memref<208x128xf32, #tpu.memory_space<vmem>>, vector<16x32xf32>
    %c80 = arith.constant 80 : index
    %c0_10 = arith.constant 0 : index
    %16 = vector.load %arg2[%c80, %c0_10] : memref<208x128xf32, #tpu.memory_space<vmem>>, vector<1x32xf32>
    %cst_11 = arith.constant dense<0.000000e+00> : vector<256x32xf32>
    %17 = tpu.matmul %14, %15, %cst_11 {dimension_numbers = #tpu.dot_dimension_numbers<[1], [0], [0], [1], [0, 0, 1, 1], [], []>} : vector<256x16xf32>, vector<16x32xf32>, vector<256x32xf32> -> vector<256x32xf32>
    %18 = vector.broadcast %16 : vector<1x32xf32> to vector<256x32xf32>
    %19 = arith.addf %17, %18 : vector<256x32xf32>
    %cst_12 = arith.constant 0.000000e+00 : f32
    %20 = vector.broadcast %cst_12 : f32 to vector<256x32xf32>
    %21 = arith.maximumf %19, %20 : vector<256x32xf32>
    %c96 = arith.constant 96 : index
    %c0_13 = arith.constant 0 : index
    %22 = vector.load %arg2[%c96, %c0_13] : memref<208x128xf32, #tpu.memory_space<vmem>>, vector<32x16xf32>
    %c128 = arith.constant 128 : index
    %c0_14 = arith.constant 0 : index
    %23 = vector.load %arg2[%c128, %c0_14] : memref<208x128xf32, #tpu.memory_space<vmem>>, vector<1x16xf32>
    %cst_15 = arith.constant dense<0.000000e+00> : vector<256x16xf32>
    %24 = tpu.matmul %21, %22, %cst_15 {dimension_numbers = #tpu.dot_dimension_numbers<[1], [0], [0], [1], [0, 0, 1, 1], [], []>} : vector<256x32xf32>, vector<32x16xf32>, vector<256x16xf32> -> vector<256x16xf32>
    %25 = vector.broadcast %23 : vector<1x16xf32> to vector<256x16xf32>
    %26 = arith.addf %24, %25 : vector<256x16xf32>
    %cst_16 = arith.constant 0.000000e+00 : f32
    %27 = vector.broadcast %cst_16 : f32 to vector<256x16xf32>
    %28 = arith.maximumf %26, %27 : vector<256x16xf32>
    %c144 = arith.constant 144 : index
    %c0_17 = arith.constant 0 : index
    %29 = vector.load %arg2[%c144, %c0_17] : memref<208x128xf32, #tpu.memory_space<vmem>>, vector<16x16xf32>
    %c160 = arith.constant 160 : index
    %c0_18 = arith.constant 0 : index
    %30 = vector.load %arg2[%c160, %c0_18] : memref<208x128xf32, #tpu.memory_space<vmem>>, vector<1x16xf32>
    %cst_19 = arith.constant dense<0.000000e+00> : vector<256x16xf32>
    %31 = tpu.matmul %28, %29, %cst_19 {dimension_numbers = #tpu.dot_dimension_numbers<[1], [0], [0], [1], [0, 0, 1, 1], [], []>} : vector<256x16xf32>, vector<16x16xf32>, vector<256x16xf32> -> vector<256x16xf32>
    %32 = vector.broadcast %30 : vector<1x16xf32> to vector<256x16xf32>
    %33 = arith.addf %31, %32 : vector<256x16xf32>
    %cst_20 = arith.constant 0.000000e+00 : f32
    %34 = vector.broadcast %cst_20 : f32 to vector<256x16xf32>
    %35 = arith.maximumf %33, %34 : vector<256x16xf32>
    %c176 = arith.constant 176 : index
    %c0_21 = arith.constant 0 : index
    %36 = vector.load %arg2[%c176, %c0_21] : memref<208x128xf32, #tpu.memory_space<vmem>>, vector<16x4xf32>
    %c192 = arith.constant 192 : index
    %c0_22 = arith.constant 0 : index
    %37 = vector.load %arg2[%c192, %c0_22] : memref<208x128xf32, #tpu.memory_space<vmem>>, vector<1x4xf32>
    %cst_23 = arith.constant dense<0.000000e+00> : vector<256x4xf32>
    %38 = tpu.matmul %35, %36, %cst_23 {dimension_numbers = #tpu.dot_dimension_numbers<[1], [0], [0], [1], [0, 0, 1, 1], [], []>} : vector<256x16xf32>, vector<16x4xf32>, vector<256x4xf32> -> vector<256x4xf32>
    %39 = vector.broadcast %37 : vector<1x4xf32> to vector<256x4xf32>
    %40 = arith.addf %38, %39 : vector<256x4xf32>
    %cst_24 = arith.constant 0.000000e+00 : f32
    %41 = vector.broadcast %cst_24 : f32 to vector<256x4xf32>
    %42 = arith.maximumf %40, %41 : vector<256x4xf32>
    %c0_25 = arith.constant 0 : index
    %c0_26 = arith.constant 0 : index
    %43 = vector.load %arg3[%c0_25, %c0_26] : memref<256x4xf32, #tpu.memory_space<vmem>>, vector<256x4xf32>
    tpu.vector_store %arg3[%c0_25, %c0_26], %42 {strides = array<i32>} : memref<256x4xf32, #tpu.memory_space<vmem>>, vector<256x4xf32>,
    return
  }
  func.func @transform_0(%arg0: i32) -> (i32, i32) {
    %c0_i32 = arith.constant 0 : i32
    %c0_i32_0 = arith.constant 0 : i32
    return %arg0, %c0_i32 : i32, i32
  }
  func.func @transform_1(%arg0: i32) -> (i32, i32) {
    %c0_i32 = arith.constant 0 : i32
    %c0_i32_0 = arith.constant 0 : i32
    %c0_i32_1 = arith.constant 0 : i32
    return %c0_i32, %c0_i32_0 : i32, i32
  }
  func.func @transform_2(%arg0: i32) -> (i32, i32) {
    %c0_i32 = arith.constant 0 : i32
    %c0_i32_0 = arith.constant 0 : i32
    return %arg0, %c0_i32 : i32, i32
  }
}

</mosaic_0001>

<llo_original>
// kernel: tpu_custom_call.1
$region0: #{tpu_custom_call.1}
  #allocation0 [shape = 'u32[]', space=smem, size = 0x4, offset = 0x4, fixed_abs, tag = 'smem constant byte address 0x4 - core index']
  #allocation1 [shape = 'u32[72,128]{1,0:T(1,128)}', space=vmem, size = 0x9000, scoped, tag = 'internal scratch']
  %s0 = inlined_call_operand.vmem [shape: f32[512,8], index: 0, kind: input, shape index: {}]
  %s1 = inlined_call_operand.vmem [shape: f32[208,128], index: 1, kind: input, shape index: {}]
  %s2 = inlined_call_operand.vmem [shape: f32[512,4], index: 2, kind: output, shape index: {}]
  %s3 = sld [smem:[#allocation0]]
  $region41: #{tpu_custom_call.1} parent=0
    _
  %s5 = ssub.s32 1, %s3
  %s6 = scalar_select 0, %s5, %s3
  loop: start=0, step=1, limit=4
  $region2: #{tpu_custom_call.1} parent=0 // loop_pre_header
    _
  $region3: #{tpu_custom_call.1} parent=0 // loop_header
    %s8 = sphi 0, %s12
    %p9 = scmp.ge.s32.totalorder %s8, 4
    %s18 = sphi 0, %s20
    %s21 = sphi 0, %s18
    %s22 = sphi 0, %s21
    %s38 = sphi 0, %s22
    %s42 = sphi 0, %s42
    %s44 = sphi 0, %s42
    %s45 = sphi 0, %s44
    %s59 = sphi 0, %s45
    %s65 = sphi 0, %s67
    %s68 = sphi 0, %s65
    %s69 = sphi 0, %s68
    %s85 = sphi 0, %s69
  $region4: #{tpu_custom_call.1} parent=0 // loop_header_branch
    %11 = sbr.rel (%p9) target = $region8
  $region5: #{tpu_custom_call.1} parent=0 // loop_body
    %s13 = ssub.s32 %s8, 1
    %s14 = ssub.s32 %s8, 2
    %s15 = sadd.s32 %s8, 1
    %s16 = ssub.s32 %s8, %s15
    %p17 = scmp.eq.s32.totalorder %s16, 0
    %s19 = sadd.s32 %s18, 1
    %s20 = scalar_select %p17, %s18, %s19
    %p23 = pneg %p17
    %p24 = scmp.eq.s32.totalorder %s8, 1
    %p25 = por %p23, %p24
    %p26 = scmp.ne.s32.totalorder %s18, %s21
    %p27 = scmp.eq.s32.totalorder %s8, 0
    %p28 = por %p26, %p27
    %p29 = scmp.ne.s32.totalorder %s18, %s21
    %p30 = scmp.eq.s32.totalorder %s13, 1
    %p31 = por %p29, %p30
    %p32 = scmp.ne.s32.totalorder %s21, %s22
    %p33 = scmp.eq.s32.totalorder %s13, 0
    %p34 = por %p32, %p33
    %p35 = scmp.ne.s32.totalorder %s21, %s22
    %p36 = scmp.eq.s32.totalorder %s14, 1
    %p37 = por %p35, %p36
    %p39 = scmp.ne.s32.totalorder %s22, %s38
    %p40 = scmp.eq.s32.totalorder %s14, 0
    %p41 = por %p39, %p40
    %s43 = sadd.s32 %s42, 1
    %p46 = scmp.eq.s32.totalorder %s8, 1
    %p47 = scmp.ne.s32.totalorder %s42, %s44
    %p48 = scmp.eq.s32.totalorder %s8, 0
    %p49 = por %p47, %p48
    %p50 = scmp.ne.s32.totalorder %s42, %s44
    %p51 = scmp.eq.s32.totalorder %s13, 1
    %p52 = por %p50, %p51
    %p53 = scmp.ne.s32.totalorder %s44, %s45
    %p54 = scmp.eq.s32.totalorder %s13, 0
    %p55 = por %p53, %p54
    %p56 = scmp.ne.s32.totalorder %s44, %s45
    %p57 = scmp.eq.s32.totalorder %s14, 1
    %p58 = por %p56, %p57
    %p60 = scmp.ne.s32.totalorder %s45, %s59
    %p61 = scmp.eq.s32.totalorder %s14, 0
    %p62 = por %p60, %p61
    %s63 = ssub.s32 %s8, %s15
    %p64 = scmp.eq.s32.totalorder %s63, 0
    %s66 = sadd.s32 %s65, 1
    %s67 = scalar_select %p64, %s65, %s66
    %p70 = pneg %p64
    %p71 = scmp.eq.s32.totalorder %s8, 1
    %p72 = por %p70, %p71
    %p73 = scmp.ne.s32.totalorder %s65, %s68
    %p74 = scmp.eq.s32.totalorder %s8, 0
    %p75 = por %p73, %p74
    %p76 = scmp.ne.s32.totalorder %s65, %s68
    %p77 = scmp.eq.s32.totalorder %s13, 1
    %p78 = por %p76, %p77
    %p79 = scmp.ne.s32.totalorder %s68, %s69
    %p80 = scmp.eq.s32.totalorder %s13, 0
    %p81 = por %p79, %p80
    %p82 = scmp.ne.s32.totalorder %s68, %s69
    %p83 = scmp.eq.s32.totalorder %s14, 1
    %p84 = por %p82, %p83
    %p86 = scmp.ne.s32.totalorder %s69, %s85
    %p87 = scmp.eq.s32.totalorder %s14, 0
    %p88 = por %p86, %p87
    %p89 = scmp.le.s32.totalorder 1, %s8
    %p90 = scmp.lt.s32.totalorder %s8, 3
    %p91 = pnand %p89, %p90
    %p92 = pneg %p91
    // Predicated region
    $region9: #{tpu_custom_call.1} parent=5 // pred_check
      _
    $region10: #{tpu_custom_call.1} parent=5 // pred_check_branch
      %94 = sbr.rel (%p91) target = $region12
    $region11: #{tpu_custom_call.1} parent=5 // pred_region
      %s95 = ssub.s32 %s8, 1
      // Predicated region
      $region13: #{tpu_custom_call.1} parent=11 // pred_check
        %p96 = pneg %p55
      $region14: #{tpu_custom_call.1} parent=11 // pred_check_branch
        %98 = sbr.rel (%p96) target = $region16
      $region15: #{tpu_custom_call.1} parent=11 // pred_region
        _
      $region16: #{tpu_custom_call.1} parent=11 // pred_fallthru
        _
    $region12: #{tpu_custom_call.1} parent=5 // pred_fallthru
      _
    %p99 = scmp.lt.s32.totalorder %s8, 2
    // Predicated region
    $region17: #{tpu_custom_call.1} parent=5 // pred_check
      %p100 = pneg %p99
    $region18: #{tpu_custom_call.1} parent=5 // pred_check_branch
      %102 = sbr.rel (%p100) target = $region20
    $region19: #{tpu_custom_call.1} parent=5 // pred_region
      // Predicated region
      $region21: #{tpu_custom_call.1} parent=19 // pred_check
        %p103 = pneg %p28
      $region22: #{tpu_custom_call.1} parent=19 // pred_check_branch
        %105 = sbr.rel (%p103) target = $region24
      $region23: #{tpu_custom_call.1} parent=19 // pred_region
        %s106 = smul.u32 32, %s8
        %p107 = scmp.lt.s32.totalorder %s106, 63
        %s108 = scalar_select %p107, %s106, 63
        %s109 = smul.addr %s108, 8
        %s110 = scalar_lea.vmem %s0, %s109
        %s111 = smul.u32 32, %s8
      $region24: #{tpu_custom_call.1} parent=19 // pred_fallthru
        _
    $region20: #{tpu_custom_call.1} parent=5 // pred_fallthru
      _
    %p112 = scmp.le.s32.totalorder 1, %s8
    %p113 = scmp.lt.s32.totalorder %s8, 3
    %p114 = pnand %p112, %p113
    %p115 = pneg %p114
    // Predicated region
    $region25: #{tpu_custom_call.1} parent=5 // pred_check
      _
    $region26: #{tpu_custom_call.1} parent=5 // pred_check_branch
      %117 = sbr.rel (%p114) target = $region28
    $region27: #{tpu_custom_call.1} parent=5 // pred_region
      %s118 = ssub.s32 %s8, 1
      %s119 = smul.u32 32, %s13
      %p120 = scmp.lt.s32.totalorder %s119, 63
      %s121 = scalar_select %p120, %s119, 63
      %s122 = smul.addr %s121, 8
      %s123 = scalar_lea.vmem %s0, %s122
      %p124 = pneg %p34
      %p125 = pneg %p31
      %p126 = pneg %p55
      %p127 = pneg %p52
      %p128 = pneg %p81
      %p129 = pneg %p78
      %s130 = smul.u32 32, %s13
      %p131 = scmp.lt.s32.totalorder %s130, 63
      %s132 = scalar_select %p131, %s130, 63
      %s133 = smul.addr %s132, 8
      %s134 = scalar_lea.vmem %s2, %s133
      %s135 = smul.u32 32, %s13
      %p136 = scmp.lt.s32.totalorder %s135, 63
      %s137 = scalar_select %p136, %s135, 63
      %s138 = smul.addr %s137, 8
      %s139 = scalar_lea.vmem %s0, %s138
      %s140 = smul.u32 32, %s13
      %s141 = smul.u32 32, %s13
      %p142 = scmp.lt.s32.totalorder %s141, 63
      %s143 = scalar_select %p142, %s141, 63
      %s144 = smul.addr %s143, 8
      %s145 = scalar_lea.vmem %s2, %s144
      %s146 = smul.u32 32, %s13
      %v147 = vld [vmem:[%s139] sm:$0xff]
      %v148 = vld [vmem:[%s139 + $0x8] sm:$0xff]
      %v149 = vld [vmem:[%s139 + $0x10] sm:$0xff]
      %v150 = vld [vmem:[%s139 + $0x18] sm:$0xff]
      %v151 = vld [vmem:[%s139 + $0x20] sm:$0xff]
      %v152 = vld [vmem:[%s139 + $0x28] sm:$0xff]
      %v153 = vld [vmem:[%s139 + $0x30] sm:$0xff]
      %v154 = vld [vmem:[%s139 + $0x38] sm:$0xff]
      %v155 = vld [vmem:[%s139 + $0x40] sm:$0xff]
      %v156 = vld [vmem:[%s139 + $0x48] sm:$0xff]
      %v157 = vld [vmem:[%s139 + $0x50] sm:$0xff]
      %v158 = vld [vmem:[%s139 + $0x58] sm:$0xff]
      %v159 = vld [vmem:[%s139 + $0x60] sm:$0xff]
      %v160 = vld [vmem:[%s139 + $0x68] sm:$0xff]
      %v161 = vld [vmem:[%s139 + $0x70] sm:$0xff]
      %v162 = vld [vmem:[%s139 + $0x78] sm:$0xff]
      %v163 = vld [vmem:[%s139 + $0x80] sm:$0xff]
      %v164 = vld [vmem:[%s139 + $0x88] sm:$0xff]
      %v165 = vld [vmem:[%s139 + $0x90] sm:$0xff]
      %v166 = vld [vmem:[%s139 + $0x98] sm:$0xff]
      %v167 = vld [vmem:[%s139 + $0xa0] sm:$0xff]
      %v168 = vld [vmem:[%s139 + $0xa8] sm:$0xff]
      %v169 = vld [vmem:[%s139 + $0xb0] sm:$0xff]
      %v170 = vld [vmem:[%s139 + $0xb8] sm:$0xff]
      %v171 = vld [vmem:[%s139 + $0xc0] sm:$0xff]
      %v172 = vld [vmem:[%s139 + $0xc8] sm:$0xff]
      %v173 = vld [vmem:[%s139 + $0xd0] sm:$0xff]
      %v174 = vld [vmem:[%s139 + $0xd8] sm:$0xff]
      %v175 = vld [vmem:[%s139 + $0xe0] sm:$0xff]
      %v176 = vld [vmem:[%s139 + $0xe8] sm:$0xff]
      %v177 = vld [vmem:[%s139 + $0xf0] sm:$0xff]
      %v178 = vld [vmem:[%s139 + $0xf8] sm:$0xff]
      %v179 = vld [vmem:[%s1] sm:$0xff]
      %v180 = vld [vmem:[%s1 + $0x10] sm:$0x1]
      %v181 = vperm.slane %v180, 0
      %vm182 = vcmask 64512
      %v184 = vsel %vm182, %v147, 0
      %v187 = vsel %vm182, %v148, 0
      %v190 = vsel %vm182, %v149, 0
      %v193 = vsel %vm182, %v150, 0
      %v196 = vsel %vm182, %v151, 0
      %v199 = vsel %vm182, %v152, 0
      %v202 = vsel %vm182, %v153, 0
      %v205 = vsel %vm182, %v154, 0
      %v208 = vsel %vm182, %v155, 0
      %v211 = vsel %vm182, %v156, 0
      %v214 = vsel %vm182, %v157, 0
      %v217 = vsel %vm182, %v158, 0
      %v220 = vsel %vm182, %v159, 0
      %v223 = vsel %vm182, %v160, 0
      %v226 = vsel %vm182, %v161, 0
      %v229 = vsel %vm182, %v162, 0
      %v232 = vsel %vm182, %v163, 0
      %v235 = vsel %vm182, %v164, 0
      %v238 = vsel %vm182, %v165, 0
      %v241 = vsel %vm182, %v166, 0
      %v244 = vsel %vm182, %v167, 0
      %v247 = vsel %vm182, %v168, 0
      %v250 = vsel %vm182, %v169, 0
      %v253 = vsel %vm182, %v170, 0
      %v256 = vsel %vm182, %v171, 0
      %v259 = vsel %vm182, %v172, 0
      %v262 = vsel %vm182, %v173, 0
      %v265 = vsel %vm182, %v174, 0
      %v268 = vsel %vm182, %v175, 0
      %v271 = vsel %vm182, %v176, 0
      %v274 = vsel %vm182, %v177, 0
      %v277 = vsel %vm182, %v178, 0
      %279 = vmatpush.msra.mxu0 0.0
      %280 = vmatpush.msra.mxu0 0.0
      %281 = vmatpush.msra.mxu0 0.0
      %282 = vmatpush.msra.mxu0 0.0
      %283 = vmatpush.msra.mxu0 0.0
      %284 = vmatpush.msra.mxu0 0.0
      %285 = vmatpush.msra.mxu0 0.0
      %286 = vmatpush.msra.mxu0 0.0
      %287 = vmatpush.msra.mxu0 0.0
      %288 = vmatpush.msra.mxu0 0.0
      %289 = vmatpush.msra.mxu0 0.0
      %290 = vmatpush.msra.mxu0 0.0
      %291 = vmatpush.msra.mxu0 0.0
      %292 = vmatpush.msra.mxu0 0.0
      %293 = vmatpush.msra.mxu0 0.0
      %294 = vmatpush.msra.mxu0 %v179
      %295 = vmatmul.f32.gmra.mxu0 %v184
      %v296 = vpop.f32.mrf.mxu0
      %v297 = vadd.f32 %v181, %v296
      %298 = vmatmul.f32.gmra.mxu0 %v187
      %v299 = vpop.f32.mrf.mxu0
      %v300 = vadd.f32 %v181, %v299
      %301 = vmatmul.f32.gmra.mxu0 %v190
      %v302 = vpop.f32.mrf.mxu0
      %v303 = vadd.f32 %v181, %v302
      %304 = vmatmul.f32.gmra.mxu0 %v193
      %v305 = vpop.f32.mrf.mxu0
      %v306 = vadd.f32 %v181, %v305
      %307 = vmatmul.f32.gmra.mxu0 %v196
      %v308 = vpop.f32.mrf.mxu0
      %v309 = vadd.f32 %v181, %v308
      %310 = vmatmul.f32.gmra.mxu0 %v199
      %v311 = vpop.f32.mrf.mxu0
      %v312 = vadd.f32 %v181, %v311
      %313 = vmatmul.f32.gmra.mxu0 %v202
      %v314 = vpop.f32.mrf.mxu0
      %v315 = vadd.f32 %v181, %v314
      %316 = vmatmul.f32.gmra.mxu0 %v205
      %v317 = vpop.f32.mrf.mxu0
      %v318 = vadd.f32 %v181, %v317
      %319 = vmatmul.f32.gmra.mxu0 %v208
      %v320 = vpop.f32.mrf.mxu0
      %v321 = vadd.f32 %v181, %v320
      %322 = vmatmul.f32.gmra.mxu0 %v211
      %v323 = vpop.f32.mrf.mxu0
      %v324 = vadd.f32 %v181, %v323
      %325 = vmatmul.f32.gmra.mxu0 %v214
      %v326 = vpop.f32.mrf.mxu0
      %v327 = vadd.f32 %v181, %v326
      %328 = vmatmul.f32.gmra.mxu0 %v217
      %v329 = vpop.f32.mrf.mxu0
      %v330 = vadd.f32 %v181, %v329
      %331 = vmatmul.f32.gmra.mxu0 %v220
      %v332 = vpop.f32.mrf.mxu0
      %v333 = vadd.f32 %v181, %v332
      %334 = vmatmul.f32.gmra.mxu0 %v223
      %v335 = vpop.f32.mrf.mxu0
      %v336 = vadd.f32 %v181, %v335
      %337 = vmatmul.f32.gmra.mxu0 %v226
      %v338 = vpop.f32.mrf.mxu0
      %v339 = vadd.f32 %v181, %v338
      %340 = vmatmul.f32.gmra.mxu0 %v229
      %v341 = vpop.f32.mrf.mxu0
      %v342 = vadd.f32 %v181, %v341
      %343 = vmatmul.f32.gmra.mxu0 %v232
      %v344 = vpop.f32.mrf.mxu0
      %v345 = vadd.f32 %v181, %v344
      %346 = vmatmul.f32.gmra.mxu0 %v235
      %v347 = vpop.f32.mrf.mxu0
      %v348 = vadd.f32 %v181, %v347
      %349 = vmatmul.f32.gmra.mxu0 %v238
      %v350 = vpop.f32.mrf.mxu0
      %v351 = vadd.f32 %v181, %v350
      %352 = vmatmul.f32.gmra.mxu0 %v241
      %v353 = vpop.f32.mrf.mxu0
      %v354 = vadd.f32 %v181, %v353
      %355 = vmatmul.f32.gmra.mxu0 %v244
      %v356 = vpop.f32.mrf.mxu0
      %v357 = vadd.f32 %v181, %v356
      %358 = vmatmul.f32.gmra.mxu0 %v247
      %v359 = vpop.f32.mrf.mxu0
      %v360 = vadd.f32 %v181, %v359
      %361 = vmatmul.f32.gmra.mxu0 %v250
      %v362 = vpop.f32.mrf.mxu0
      %v363 = vadd.f32 %v181, %v362
      %364 = vmatmul.f32.gmra.mxu0 %v253
      %v365 = vpop.f32.mrf.mxu0
      %v366 = vadd.f32 %v181, %v365
      %367 = vmatmul.f32.gmra.mxu0 %v256
      %v368 = vpop.f32.mrf.mxu0
      %v369 = vadd.f32 %v181, %v368
      %370 = vmatmul.f32.gmra.mxu0 %v259
      %v371 = vpop.f32.mrf.mxu0
      %v372 = vadd.f32 %v181, %v371
      %373 = vmatmul.f32.gmra.mxu0 %v262
      %v374 = vpop.f32.mrf.mxu0
      %v375 = vadd.f32 %v181, %v374
      %376 = vmatmul.f32.gmra.mxu0 %v265
      %v377 = vpop.f32.mrf.mxu0
      %v378 = vadd.f32 %v181, %v377
      %379 = vmatmul.f32.gmra.mxu0 %v268
      %v380 = vpop.f32.mrf.mxu0
      %v381 = vadd.f32 %v181, %v380
      %382 = vmatmul.f32.gmra.mxu0 %v271
      %v383 = vpop.f32.mrf.mxu0
      %v384 = vadd.f32 %v181, %v383
      %385 = vmatmul.f32.gmra.mxu0 %v274
      %v386 = vpop.f32.mrf.mxu0
      %v387 = vadd.f32 %v181, %v386
      %388 = vmatmul.f32.gmra.mxu0 %v277
      %v389 = vpop.f32.mrf.mxu0
      %v390 = vadd.f32 %v181, %v389
      %391 = vdwg.mxu0
      %v392 = vmax.f32 %v297, 0.0
      %v393 = vmax.f32 %v300, 0.0
      %v394 = vmax.f32 %v303, 0.0
      %v395 = vmax.f32 %v306, 0.0
      %v396 = vmax.f32 %v309, 0.0
      %v397 = vmax.f32 %v312, 0.0
      %v398 = vmax.f32 %v315, 0.0
      %v399 = vmax.f32 %v318, 0.0
      %v400 = vmax.f32 %v321, 0.0
      %v401 = vmax.f32 %v324, 0.0
      %v402 = vmax.f32 %v327, 0.0
      %v403 = vmax.f32 %v330, 0.0
      %v404 = vmax.f32 %v333, 0.0
      %v405 = vmax.f32 %v336, 0.0
      %v406 = vmax.f32 %v339, 0.0
      %v407 = vmax.f32 %v342, 0.0
      %v408 = vmax.f32 %v345, 0.0
      %v409 = vmax.f32 %v348, 0.0
      %v410 = vmax.f32 %v351, 0.0
      %v411 = vmax.f32 %v354, 0.0
      %v412 = vmax.f32 %v357, 0.0
      %v413 = vmax.f32 %v360, 0.0
      %v414 = vmax.f32 %v363, 0.0
      %v415 = vmax.f32 %v366, 0.0
      %v416 = vmax.f32 %v369, 0.0
      %v417 = vmax.f32 %v372, 0.0
      %v418 = vmax.f32 %v375, 0.0
      %v419 = vmax.f32 %v378, 0.0
      %v420 = vmax.f32 %v381, 0.0
      %v421 = vmax.f32 %v384, 0.0
      %v422 = vmax.f32 %v387, 0.0
      %v423 = vmax.f32 %v390, 0.0
      %v424 = vld [vmem:[%s1 + $0x20] sm:$0xff]
      %v425 = vld [vmem:[%s1 + $0x30] sm:$0x1]
      %v426 = vperm.slane %v425, 0
      %v428 = vsel %vm182, %v392, 0
      %v431 = vsel %vm182, %v393, 0
      %v434 = vsel %vm182, %v394, 0
      %v437 = vsel %vm182, %v395, 0
      %v440 = vsel %vm182, %v396, 0
      %v443 = vsel %vm182, %v397, 0
      %v446 = vsel %vm182, %v398, 0
      %v449 = vsel %vm182, %v399, 0
      %v452 = vsel %vm182, %v400, 0
      %v455 = vsel %vm182, %v401, 0
      %v458 = vsel %vm182, %v402, 0
      %v461 = vsel %vm182, %v403, 0
      %v464 = vsel %vm182, %v404, 0
      %v467 = vsel %vm182, %v405, 0
      %v470 = vsel %vm182, %v406, 0
      %v473 = vsel %vm182, %v407, 0
      %v476 = vsel %vm182, %v408, 0
      %v479 = vsel %vm182, %v409, 0
      %v482 = vsel %vm182, %v410, 0
      %v485 = vsel %vm182, %v411, 0
      %v488 = vsel %vm182, %v412, 0
      %v491 = vsel %vm182, %v413, 0
      %v494 = vsel %vm182, %v414, 0
      %v497 = vsel %vm182, %v415, 0
      %v500 = vsel %vm182, %v416, 0
      %v503 = vsel %vm182, %v417, 0
      %v506 = vsel %vm182, %v418, 0
      %v509 = vsel %vm182, %v419, 0
      %v512 = vsel %vm182, %v420, 0
      %v515 = vsel %vm182, %v421, 0
      %v518 = vsel %vm182, %v422, 0
      %v521 = vsel %vm182, %v423, 0
      %523 = vmatpush.msra.mxu0 0.0
      %524 = vmatpush.msra.mxu0 0.0
      %525 = vmatpush.msra.mxu0 0.0
      %526 = vmatpush.msra.mxu0 0.0
      %527 = vmatpush.msra.mxu0 0.0
      %528 = vmatpush.msra.mxu0 0.0
      %529 = vmatpush.msra.mxu0 0.0
      %530 = vmatpush.msra.mxu0 0.0
      %531 = vmatpush.msra.mxu0 0.0
      %532 = vmatpush.msra.mxu0 0.0
      %533 = vmatpush.msra.mxu0 0.0
      %534 = vmatpush.msra.mxu0 0.0
      %535 = vmatpush.msra.mxu0 0.0
      %536 = vmatpush.msra.mxu0 0.0
      %537 = vmatpush.msra.mxu0 0.0
      %538 = vmatpush.msra.mxu0 %v424
      %539 = vmatmul.f32.gmra.mxu0 %v428
      %v540 = vpop.f32.mrf.mxu0
      %v541 = vadd.f32 %v426, %v540
      %542 = vmatmul.f32.gmra.mxu0 %v431
      %v543 = vpop.f32.mrf.mxu0
      %v544 = vadd.f32 %v426, %v543
      %545 = vmatmul.f32.gmra.mxu0 %v434
      %v546 = vpop.f32.mrf.mxu0
      %v547 = vadd.f32 %v426, %v546
      %548 = vmatmul.f32.gmra.mxu0 %v437
      %v549 = vpop.f32.mrf.mxu0
      %v550 = vadd.f32 %v426, %v549
      %551 = vmatmul.f32.gmra.mxu0 %v440
      %v552 = vpop.f32.mrf.mxu0
      %v553 = vadd.f32 %v426, %v552
      %554 = vmatmul.f32.gmra.mxu0 %v443
      %v555 = vpop.f32.mrf.mxu0
      %v556 = vadd.f32 %v426, %v555
      %557 = vmatmul.f32.gmra.mxu0 %v446
      %v558 = vpop.f32.mrf.mxu0
      %v559 = vadd.f32 %v426, %v558
      %560 = vmatmul.f32.gmra.mxu0 %v449
      %v561 = vpop.f32.mrf.mxu0
      %v562 = vadd.f32 %v426, %v561
      %563 = vmatmul.f32.gmra.mxu0 %v452
      %v564 = vpop.f32.mrf.mxu0
      %v565 = vadd.f32 %v426, %v564
      %566 = vmatmul.f32.gmra.mxu0 %v455
      %v567 = vpop.f32.mrf.mxu0
      %v568 = vadd.f32 %v426, %v567
      %569 = vmatmul.f32.gmra.mxu0 %v458
      %v570 = vpop.f32.mrf.mxu0
      %v571 = vadd.f32 %v426, %v570
      %572 = vmatmul.f32.gmra.mxu0 %v461
      %v573 = vpop.f32.mrf.mxu0
      %v574 = vadd.f32 %v426, %v573
      %575 = vmatmul.f32.gmra.mxu0 %v464
      %v576 = vpop.f32.mrf.mxu0
      %v577 = vadd.f32 %v426, %v576
      %578 = vmatmul.f32.gmra.mxu0 %v467
      %v579 = vpop.f32.mrf.mxu0
      %v580 = vadd.f32 %v426, %v579
      %581 = vmatmul.f32.gmra.mxu0 %v470
      %v582 = vpop.f32.mrf.mxu0
      %v583 = vadd.f32 %v426, %v582
      %584 = vmatmul.f32.gmra.mxu0 %v473
      %v585 = vpop.f32.mrf.mxu0
      %v586 = vadd.f32 %v426, %v585
      %587 = vmatmul.f32.gmra.mxu0 %v476
      %v588 = vpop.f32.mrf.mxu0
      %v589 = vadd.f32 %v426, %v588
      %590 = vmatmul.f32.gmra.mxu0 %v479
      %v591 = vpop.f32.mrf.mxu0
      %v592 = vadd.f32 %v426, %v591
      %593 = vmatmul.f32.gmra.mxu0 %v482
      %v594 = vpop.f32.mrf.mxu0
      %v595 = vadd.f32 %v426, %v594
      %596 = vmatmul.f32.gmra.mxu0 %v485
      %v597 = vpop.f32.mrf.mxu0
      %v598 = vadd.f32 %v426, %v597
      %599 = vmatmul.f32.gmra.mxu0 %v488
      %v600 = vpop.f32.mrf.mxu0
      %v601 = vadd.f32 %v426, %v600
      %602 = vmatmul.f32.gmra.mxu0 %v491
      %v603 = vpop.f32.mrf.mxu0
      %v604 = vadd.f32 %v426, %v603
      %605 = vmatmul.f32.gmra.mxu0 %v494
      %v606 = vpop.f32.mrf.mxu0
      %v607 = vadd.f32 %v426, %v606
      %608 = vmatmul.f32.gmra.mxu0 %v497
      %v609 = vpop.f32.mrf.mxu0
      %v610 = vadd.f32 %v426, %v609
      %611 = vmatmul.f32.gmra.mxu0 %v500
      %v612 = vpop.f32.mrf.mxu0
      %v613 = vadd.f32 %v426, %v612
      %614 = vmatmul.f32.gmra.mxu0 %v503
      %v615 = vpop.f32.mrf.mxu0
      %v616 = vadd.f32 %v426, %v615
      %617 = vmatmul.f32.gmra.mxu0 %v506
      %v618 = vpop.f32.mrf.mxu0
      %v619 = vadd.f32 %v426, %v618
      %620 = vmatmul.f32.gmra.mxu0 %v509
      %v621 = vpop.f32.mrf.mxu0
      %v622 = vadd.f32 %v426, %v621
      %623 = vmatmul.f32.gmra.mxu0 %v512
      %v624 = vpop.f32.mrf.mxu0
      %v625 = vadd.f32 %v426, %v624
      %626 = vmatmul.f32.gmra.mxu0 %v515
      %v627 = vpop.f32.mrf.mxu0
      %v628 = vadd.f32 %v426, %v627
      %629 = vmatmul.f32.gmra.mxu0 %v518
      %v630 = vpop.f32.mrf.mxu0
      %v631 = vadd.f32 %v426, %v630
      %632 = vmatmul.f32.gmra.mxu0 %v521
      %v633 = vpop.f32.mrf.mxu0
      %v634 = vadd.f32 %v426, %v633
      %635 = vdwg.mxu0
      %v636 = vmax.f32 %v541, 0.0
      %v637 = vmax.f32 %v544, 0.0
      %v638 = vmax.f32 %v547, 0.0
      %v639 = vmax.f32 %v550, 0.0
      %v640 = vmax.f32 %v553, 0.0
      %v641 = vmax.f32 %v556, 0.0
      %v642 = vmax.f32 %v559, 0.0
      %v643 = vmax.f32 %v562, 0.0
      %v644 = vmax.f32 %v565, 0.0
      %v645 = vmax.f32 %v568, 0.0
      %v646 = vmax.f32 %v571, 0.0
      %v647 = vmax.f32 %v574, 0.0
      %v648 = vmax.f32 %v577, 0.0
      %v649 = vmax.f32 %v580, 0.0
      %v650 = vmax.f32 %v583, 0.0
      %v651 = vmax.f32 %v586, 0.0
      %v652 = vmax.f32 %v589, 0.0
      %v653 = vmax.f32 %v592, 0.0
      %v654 = vmax.f32 %v595, 0.0
      %v655 = vmax.f32 %v598, 0.0
      %v656 = vmax.f32 %v601, 0.0
      %v657 = vmax.f32 %v604, 0.0
      %v658 = vmax.f32 %v607, 0.0
      %v659 = vmax.f32 %v610, 0.0
      %v660 = vmax.f32 %v613, 0.0
      %v661 = vmax.f32 %v616, 0.0
      %v662 = vmax.f32 %v619, 0.0
      %v663 = vmax.f32 %v622, 0.0
      %v664 = vmax.f32 %v625, 0.0
      %v665 = vmax.f32 %v628, 0.0
      %v666 = vmax.f32 %v631, 0.0
      %v667 = vmax.f32 %v634, 0.0
      %v668 = vld [vmem:[%s1 + $0x40] sm:$0xff]
      %v669 = vld [vmem:[%s1 + $0x48] sm:$0xff]
      %v670 = vld [vmem:[%s1 + $0x50] sm:$0x1]
      %v671 = vperm.slane %v670, 0
      %vm672 = vcmask 130048
      %v674 = vsel %vm672, %v636, 0
      %v677 = vsel %vm672, %v637, 0
      %v680 = vsel %vm672, %v638, 0
      %v683 = vsel %vm672, %v639, 0
      %v686 = vsel %vm672, %v640, 0
      %v689 = vsel %vm672, %v641, 0
      %v692 = vsel %vm672, %v642, 0
      %v695 = vsel %vm672, %v643, 0
      %v698 = vsel %vm672, %v644, 0
      %v701 = vsel %vm672, %v645, 0
      %v704 = vsel %vm672, %v646, 0
      %v707 = vsel %vm672, %v647, 0
      %v710 = vsel %vm672, %v648, 0
      %v713 = vsel %vm672, %v649, 0
      %v716 = vsel %vm672, %v650, 0
      %v719 = vsel %vm672, %v651, 0
      %v722 = vsel %vm672, %v652, 0
      %v725 = vsel %vm672, %v653, 0
      %v728 = vsel %vm672, %v654, 0
      %v731 = vsel %vm672, %v655, 0
      %v734 = vsel %vm672, %v656, 0
      %v737 = vsel %vm672, %v657, 0
      %v740 = vsel %vm672, %v658, 0
      %v743 = vsel %vm672, %v659, 0
      %v746 = vsel %vm672, %v660, 0
      %v749 = vsel %vm672, %v661, 0
      %v752 = vsel %vm672, %v662, 0
      %v755 = vsel %vm672, %v663, 0
      %v758 = vsel %vm672, %v664, 0
      %v761 = vsel %vm672, %v665, 0
      %v764 = vsel %vm672, %v666, 0
      %v767 = vsel %vm672, %v667, 0
      %769 = vmatpush.msra.mxu0 0.0
      %770 = vmatpush.msra.mxu0 0.0
      %771 = vmatpush.msra.mxu0 0.0
      %772 = vmatpush.msra.mxu0 0.0
      %773 = vmatpush.msra.mxu0 0.0
      %774 = vmatpush.msra.mxu0 0.0
      %775 = vmatpush.msra.mxu0 0.0
      %776 = vmatpush.msra.mxu0 0.0
      %777 = vmatpush.msra.mxu0 0.0
      %778 = vmatpush.msra.mxu0 0.0
      %779 = vmatpush.msra.mxu0 0.0
      %780 = vmatpush.msra.mxu0 0.0
      %781 = vmatpush.msra.mxu0 0.0
      %782 = vmatpush.msra.mxu0 0.0
      %783 = vmatpush.msra.mxu0 %v669
      %784 = vmatpush.msra.mxu0 %v668
      %785 = vmatmul.f32.gmra.mxu0 %v674
      %v786 = vpop.f32.mrf.mxu0
      %v787 = vadd.f32 %v671, %v786
      %788 = vmatmul.f32.gmra.mxu0 %v677
      %v789 = vpop.f32.mrf.mxu0
      %v790 = vadd.f32 %v671, %v789
      %791 = vmatmul.f32.gmra.mxu0 %v680
      %v792 = vpop.f32.mrf.mxu0
      %v793 = vadd.f32 %v671, %v792
      %794 = vmatmul.f32.gmra.mxu0 %v683
      %v795 = vpop.f32.mrf.mxu0
      %v796 = vadd.f32 %v671, %v795
      %797 = vmatmul.f32.gmra.mxu0 %v686
      %v798 = vpop.f32.mrf.mxu0
      %v799 = vadd.f32 %v671, %v798
      %800 = vmatmul.f32.gmra.mxu0 %v689
      %v801 = vpop.f32.mrf.mxu0
      %v802 = vadd.f32 %v671, %v801
      %803 = vmatmul.f32.gmra.mxu0 %v692
      %v804 = vpop.f32.mrf.mxu0
      %v805 = vadd.f32 %v671, %v804
      %806 = vmatmul.f32.gmra.mxu0 %v695
      %v807 = vpop.f32.mrf.mxu0
      %v808 = vadd.f32 %v671, %v807
      %809 = vmatmul.f32.gmra.mxu0 %v698
      %v810 = vpop.f32.mrf.mxu0
      %v811 = vadd.f32 %v671, %v810
      %812 = vmatmul.f32.gmra.mxu0 %v701
      %v813 = vpop.f32.mrf.mxu0
      %v814 = vadd.f32 %v671, %v813
      %815 = vmatmul.f32.gmra.mxu0 %v704
      %v816 = vpop.f32.mrf.mxu0
      %v817 = vadd.f32 %v671, %v816
      %818 = vmatmul.f32.gmra.mxu0 %v707
      %v819 = vpop.f32.mrf.mxu0
      %v820 = vadd.f32 %v671, %v819
      %821 = vmatmul.f32.gmra.mxu0 %v710
      %v822 = vpop.f32.mrf.mxu0
      %v823 = vadd.f32 %v671, %v822
      %824 = vmatmul.f32.gmra.mxu0 %v713
      %v825 = vpop.f32.mrf.mxu0
      %v826 = vadd.f32 %v671, %v825
      %827 = vmatmul.f32.gmra.mxu0 %v716
      %v828 = vpop.f32.mrf.mxu0
      %v829 = vadd.f32 %v671, %v828
      %830 = vmatmul.f32.gmra.mxu0 %v719
      %v831 = vpop.f32.mrf.mxu0
      %v832 = vadd.f32 %v671, %v831
      %833 = vmatmul.f32.gmra.mxu0 %v722
      %v834 = vpop.f32.mrf.mxu0
      %v835 = vadd.f32 %v671, %v834
      %836 = vmatmul.f32.gmra.mxu0 %v725
      %v837 = vpop.f32.mrf.mxu0
      %v838 = vadd.f32 %v671, %v837
      %839 = vmatmul.f32.gmra.mxu0 %v728
      %v840 = vpop.f32.mrf.mxu0
      %v841 = vadd.f32 %v671, %v840
      %842 = vmatmul.f32.gmra.mxu0 %v731
      %v843 = vpop.f32.mrf.mxu0
      %v844 = vadd.f32 %v671, %v843
      %845 = vmatmul.f32.gmra.mxu0 %v734
      %v846 = vpop.f32.mrf.mxu0
      %v847 = vadd.f32 %v671, %v846
      %848 = vmatmul.f32.gmra.mxu0 %v737
      %v849 = vpop.f32.mrf.mxu0
      %v850 = vadd.f32 %v671, %v849
      %851 = vmatmul.f32.gmra.mxu0 %v740
      %v852 = vpop.f32.mrf.mxu0
      %v853 = vadd.f32 %v671, %v852
      %854 = vmatmul.f32.gmra.mxu0 %v743
      %v855 = vpop.f32.mrf.mxu0
      %v856 = vadd.f32 %v671, %v855
      %857 = vmatmul.f32.gmra.mxu0 %v746
      %v858 = vpop.f32.mrf.mxu0
      %v859 = vadd.f32 %v671, %v858
      %860 = vmatmul.f32.gmra.mxu0 %v749
      %v861 = vpop.f32.mrf.mxu0
      %v862 = vadd.f32 %v671, %v861
      %863 = vmatmul.f32.gmra.mxu0 %v752
      %v864 = vpop.f32.mrf.mxu0
      %v865 = vadd.f32 %v671, %v864
      %866 = vmatmul.f32.gmra.mxu0 %v755
      %v867 = vpop.f32.mrf.mxu0
      %v868 = vadd.f32 %v671, %v867
      %869 = vmatmul.f32.gmra.mxu0 %v758
      %v870 = vpop.f32.mrf.mxu0
      %v871 = vadd.f32 %v671, %v870
      %872 = vmatmul.f32.gmra.mxu0 %v761
      %v873 = vpop.f32.mrf.mxu0
      %v874 = vadd.f32 %v671, %v873
      %875 = vmatmul.f32.gmra.mxu0 %v764
      %v876 = vpop.f32.mrf.mxu0
      %v877 = vadd.f32 %v671, %v876
      %878 = vmatmul.f32.gmra.mxu0 %v767
      %v879 = vpop.f32.mrf.mxu0
      %v880 = vadd.f32 %v671, %v879
      %881 = vdwg.mxu0
      %v882 = vmax.f32 %v787, 0.0
      %v883 = vmax.f32 %v790, 0.0
      %v884 = vmax.f32 %v793, 0.0
      %v885 = vmax.f32 %v796, 0.0
      %v886 = vmax.f32 %v799, 0.0
      %v887 = vmax.f32 %v802, 0.0
      %v888 = vmax.f32 %v805, 0.0
      %v889 = vmax.f32 %v808, 0.0
      %v890 = vmax.f32 %v811, 0.0
      %v891 = vmax.f32 %v814, 0.0
      %v892 = vmax.f32 %v817, 0.0
      %v893 = vmax.f32 %v820, 0.0
      %v894 = vmax.f32 %v823, 0.0
      %v895 = vmax.f32 %v826, 0.0
      %v896 = vmax.f32 %v829, 0.0
      %v897 = vmax.f32 %v832, 0.0
      %v898 = vmax.f32 %v835, 0.0
      %v899 = vmax.f32 %v838, 0.0
      %v900 = vmax.f32 %v841, 0.0
      %v901 = vmax.f32 %v844, 0.0
      %v902 = vmax.f32 %v847, 0.0
      %v903 = vmax.f32 %v850, 0.0
      %v904 = vmax.f32 %v853, 0.0
      %v905 = vmax.f32 %v856, 0.0
      %v906 = vmax.f32 %v859, 0.0
      %v907 = vmax.f32 %v862, 0.0
      %v908 = vmax.f32 %v865, 0.0
      %v909 = vmax.f32 %v868, 0.0
      %v910 = vmax.f32 %v871, 0.0
      %v911 = vmax.f32 %v874, 0.0
      %v912 = vmax.f32 %v877, 0.0
      %v913 = vmax.f32 %v880, 0.0
      %v914 = vld [vmem:[%s1 + $0x60] sm:$0xff]
      %v915 = vld [vmem:[%s1 + $0x68] sm:$0xff]
      %v916 = vld [vmem:[%s1 + $0x70] sm:$0xff]
      %v917 = vld [vmem:[%s1 + $0x78] sm:$0xff]
      %v918 = vld [vmem:[%s1 + $0x80] sm:$0x1]
      %v919 = vperm.slane %v918, 0
      %vm920 = vcmask 261120
      %v922 = vsel %vm920, %v882, 0
      %v925 = vsel %vm920, %v883, 0
      %v928 = vsel %vm920, %v884, 0
      %v931 = vsel %vm920, %v885, 0
      %v934 = vsel %vm920, %v886, 0
      %v937 = vsel %vm920, %v887, 0
      %v940 = vsel %vm920, %v888, 0
      %v943 = vsel %vm920, %v889, 0
      %v946 = vsel %vm920, %v890, 0
      %v949 = vsel %vm920, %v891, 0
      %v952 = vsel %vm920, %v892, 0
      %v955 = vsel %vm920, %v893, 0
      %v958 = vsel %vm920, %v894, 0
      %v961 = vsel %vm920, %v895, 0
      %v964 = vsel %vm920, %v896, 0
      %v967 = vsel %vm920, %v897, 0
      %v970 = vsel %vm920, %v898, 0
      %v973 = vsel %vm920, %v899, 0
      %v976 = vsel %vm920, %v900, 0
      %v979 = vsel %vm920, %v901, 0
      %v982 = vsel %vm920, %v902, 0
      %v985 = vsel %vm920, %v903, 0
      %v988 = vsel %vm920, %v904, 0
      %v991 = vsel %vm920, %v905, 0
      %v994 = vsel %vm920, %v906, 0
      %v997 = vsel %vm920, %v907, 0
      %v1000 = vsel %vm920, %v908, 0
      %v1003 = vsel %vm920, %v909, 0
      %v1006 = vsel %vm920, %v910, 0
      %v1009 = vsel %vm920, %v911, 0
      %v1012 = vsel %vm920, %v912, 0
      %v1015 = vsel %vm920, %v913, 0
      %1017 = vmatpush.msra.mxu0 0.0
      %1018 = vmatpush.msra.mxu0 0.0
      %1019 = vmatpush.msra.mxu0 0.0
      %1020 = vmatpush.msra.mxu0 0.0
      %1021 = vmatpush.msra.mxu0 0.0
      %1022 = vmatpush.msra.mxu0 0.0
      %1023 = vmatpush.msra.mxu0 0.0
      %1024 = vmatpush.msra.mxu0 0.0
      %1025 = vmatpush.msra.mxu0 0.0
      %1026 = vmatpush.msra.mxu0 0.0
      %1027 = vmatpush.msra.mxu0 0.0
      %1028 = vmatpush.msra.mxu0 0.0
      %1029 = vmatpush.msra.mxu0 %v917
      %1030 = vmatpush.msra.mxu0 %v916
      %1031 = vmatpush.msra.mxu0 %v915
      %1032 = vmatpush.msra.mxu0 %v914
      %1033 = vmatmul.f32.gmra.mxu0 %v922
      %v1034 = vpop.f32.mrf.mxu0
      %v1035 = vadd.f32 %v919, %v1034
      %1036 = vmatmul.f32.gmra.mxu0 %v925
      %v1037 = vpop.f32.mrf.mxu0
      %v1038 = vadd.f32 %v919, %v1037
      %1039 = vmatmul.f32.gmra.mxu0 %v928
      %v1040 = vpop.f32.mrf.mxu0
      %v1041 = vadd.f32 %v919, %v1040
      %1042 = vmatmul.f32.gmra.mxu0 %v931
      %v1043 = vpop.f32.mrf.mxu0
      %v1044 = vadd.f32 %v919, %v1043
      %1045 = vmatmul.f32.gmra.mxu0 %v934
      %v1046 = vpop.f32.mrf.mxu0
      %v1047 = vadd.f32 %v919, %v1046
      %1048 = vmatmul.f32.gmra.mxu0 %v937
      %v1049 = vpop.f32.mrf.mxu0
      %v1050 = vadd.f32 %v919, %v1049
      %1051 = vmatmul.f32.gmra.mxu0 %v940
      %v1052 = vpop.f32.mrf.mxu0
      %v1053 = vadd.f32 %v919, %v1052
      %1054 = vmatmul.f32.gmra.mxu0 %v943
      %v1055 = vpop.f32.mrf.mxu0
      %v1056 = vadd.f32 %v919, %v1055
      %1057 = vmatmul.f32.gmra.mxu0 %v946
      %v1058 = vpop.f32.mrf.mxu0
      %v1059 = vadd.f32 %v919, %v1058
      %1060 = vmatmul.f32.gmra.mxu0 %v949
      %v1061 = vpop.f32.mrf.mxu0
      %v1062 = vadd.f32 %v919, %v1061
      %1063 = vmatmul.f32.gmra.mxu0 %v952
      %v1064 = vpop.f32.mrf.mxu0
      %v1065 = vadd.f32 %v919, %v1064
      %1066 = vmatmul.f32.gmra.mxu0 %v955
      %v1067 = vpop.f32.mrf.mxu0
      %v1068 = vadd.f32 %v919, %v1067
      %1069 = vmatmul.f32.gmra.mxu0 %v958
      %v1070 = vpop.f32.mrf.mxu0
      %v1071 = vadd.f32 %v919, %v1070
      %1072 = vmatmul.f32.gmra.mxu0 %v961
      %v1073 = vpop.f32.mrf.mxu0
      %v1074 = vadd.f32 %v919, %v1073
      %1075 = vmatmul.f32.gmra.mxu0 %v964
      %v1076 = vpop.f32.mrf.mxu0
      %v1077 = vadd.f32 %v919, %v1076
      %1078 = vmatmul.f32.gmra.mxu0 %v967
      %v1079 = vpop.f32.mrf.mxu0
      %v1080 = vadd.f32 %v919, %v1079
      %1081 = vmatmul.f32.gmra.mxu0 %v970
      %v1082 = vpop.f32.mrf.mxu0
      %v1083 = vadd.f32 %v919, %v1082
      %1084 = vmatmul.f32.gmra.mxu0 %v973
      %v1085 = vpop.f32.mrf.mxu0
      %v1086 = vadd.f32 %v919, %v1085
      %1087 = vmatmul.f32.gmra.mxu0 %v976
      %v1088 = vpop.f32.mrf.mxu0
      %v1089 = vadd.f32 %v919, %v1088
      %1090 = vmatmul.f32.gmra.mxu0 %v979
      %v1091 = vpop.f32.mrf.mxu0
      %v1092 = vadd.f32 %v919, %v1091
      %1093 = vmatmul.f32.gmra.mxu0 %v982
      %v1094 = vpop.f32.mrf.mxu0
      %v1095 = vadd.f32 %v919, %v1094
      %1096 = vmatmul.f32.gmra.mxu0 %v985
      %v1097 = vpop.f32.mrf.mxu0
      %v1098 = vadd.f32 %v919, %v1097
      %1099 = vmatmul.f32.gmra.mxu0 %v988
      %v1100 = vpop.f32.mrf.mxu0
      %v1101 = vadd.f32 %v919, %v1100
      %1102 = vmatmul.f32.gmra.mxu0 %v991
      %v1103 = vpop.f32.mrf.mxu0
      %v1104 = vadd.f32 %v919, %v1103
      %1105 = vmatmul.f32.gmra.mxu0 %v994
      %v1106 = vpop.f32.mrf.mxu0
      %v1107 = vadd.f32 %v919, %v1106
      %1108 = vmatmul.f32.gmra.mxu0 %v997
      %v1109 = vpop.f32.mrf.mxu0
      %v1110 = vadd.f32 %v919, %v1109
      %1111 = vmatmul.f32.gmra.mxu0 %v1000
      %v1112 = vpop.f32.mrf.mxu0
      %v1113 = vadd.f32 %v919, %v1112
      %1114 = vmatmul.f32.gmra.mxu0 %v1003
      %v1115 = vpop.f32.mrf.mxu0
      %v1116 = vadd.f32 %v919, %v1115
      %1117 = vmatmul.f32.gmra.mxu0 %v1006
      %v1118 = vpop.f32.mrf.mxu0
      %v1119 = vadd.f32 %v919, %v1118
      %1120 = vmatmul.f32.gmra.mxu0 %v1009
      %v1121 = vpop.f32.mrf.mxu0
      %v1122 = vadd.f32 %v919, %v1121
      %1123 = vmatmul.f32.gmra.mxu0 %v1012
      %v1124 = vpop.f32.mrf.mxu0
      %v1125 = vadd.f32 %v919, %v1124
      %1126 = vmatmul.f32.gmra.mxu0 %v1015
      %v1127 = vpop.f32.mrf.mxu0
      %v1128 = vadd.f32 %v919, %v1127
      %1129 = vdwg.mxu0
      %v1130 = vmax.f32 %v1035, 0.0
      %v1131 = vmax.f32 %v1038, 0.0
      %v1132 = vmax.f32 %v1041, 0.0
      %v1133 = vmax.f32 %v1044, 0.0
      %v1134 = vmax.f32 %v1047, 0.0
      %v1135 = vmax.f32 %v1050, 0.0
      %v1136 = vmax.f32 %v1053, 0.0
      %v1137 = vmax.f32 %v1056, 0.0
      %v1138 = vmax.f32 %v1059, 0.0
      %v1139 = vmax.f32 %v1062, 0.0
      %v1140 = vmax.f32 %v1065, 0.0
      %v1141 = vmax.f32 %v1068, 0.0
      %v1142 = vmax.f32 %v1071, 0.0
      %v1143 = vmax.f32 %v1074, 0.0
      %v1144 = vmax.f32 %v1077, 0.0
      %v1145 = vmax.f32 %v1080, 0.0
      %v1146 = vmax.f32 %v1083, 0.0
      %v1147 = vmax.f32 %v1086, 0.0
      %v1148 = vmax.f32 %v1089, 0.0
      %v1149 = vmax.f32 %v1092, 0.0
      %v1150 = vmax.f32 %v1095, 0.0
      %v1151 = vmax.f32 %v1098, 0.0
      %v1152 = vmax.f32 %v1101, 0.0
      %v1153 = vmax.f32 %v1104, 0.0
      %v1154 = vmax.f32 %v1107, 0.0
      %v1155 = vmax.f32 %v1110, 0.0
      %v1156 = vmax.f32 %v1113, 0.0
      %v1157 = vmax.f32 %v1116, 0.0
      %v1158 = vmax.f32 %v1119, 0.0
      %v1159 = vmax.f32 %v1122, 0.0
      %v1160 = vmax.f32 %v1125, 0.0
      %v1161 = vmax.f32 %v1128, 0.0
      %v1162 = vld [vmem:[%s1 + $0x90] sm:$0xff]
      %v1163 = vld [vmem:[%s1 + $0x98] sm:$0xff]
      %v1164 = vld [vmem:[%s1 + $0xa0] sm:$0x1]
      %v1165 = vperm.slane %v1164, 0
      %v1167 = vsel %vm672, %v1130, 0
      %v1170 = vsel %vm672, %v1131, 0
      %v1173 = vsel %vm672, %v1132, 0
      %v1176 = vsel %vm672, %v1133, 0
      %v1179 = vsel %vm672, %v1134, 0
      %v1182 = vsel %vm672, %v1135, 0
      %v1185 = vsel %vm672, %v1136, 0
      %v1188 = vsel %vm672, %v1137, 0
      %v1191 = vsel %vm672, %v1138, 0
      %v1194 = vsel %vm672, %v1139, 0
      %v1197 = vsel %vm672, %v1140, 0
      %v1200 = vsel %vm672, %v1141, 0
      %v1203 = vsel %vm672, %v1142, 0
      %v1206 = vsel %vm672, %v1143, 0
      %v1209 = vsel %vm672, %v1144, 0
      %v1212 = vsel %vm672, %v1145, 0
      %v1215 = vsel %vm672, %v1146, 0
      %v1218 = vsel %vm672, %v1147, 0
      %v1221 = vsel %vm672, %v1148, 0
      %v1224 = vsel %vm672, %v1149, 0
      %v1227 = vsel %vm672, %v1150, 0
      %v1230 = vsel %vm672, %v1151, 0
      %v1233 = vsel %vm672, %v1152, 0
      %v1236 = vsel %vm672, %v1153, 0
      %v1239 = vsel %vm672, %v1154, 0
      %v1242 = vsel %vm672, %v1155, 0
      %v1245 = vsel %vm672, %v1156, 0
      %v1248 = vsel %vm672, %v1157, 0
      %v1251 = vsel %vm672, %v1158, 0
      %v1254 = vsel %vm672, %v1159, 0
      %v1257 = vsel %vm672, %v1160, 0
      %v1260 = vsel %vm672, %v1161, 0
      %1262 = vmatpush.msra.mxu0 0.0
      %1263 = vmatpush.msra.mxu0 0.0
      %1264 = vmatpush.msra.mxu0 0.0
      %1265 = vmatpush.msra.mxu0 0.0
      %1266 = vmatpush.msra.mxu0 0.0
      %1267 = vmatpush.msra.mxu0 0.0
      %1268 = vmatpush.msra.mxu0 0.0
      %1269 = vmatpush.msra.mxu0 0.0
      %1270 = vmatpush.msra.mxu0 0.0
      %1271 = vmatpush.msra.mxu0 0.0
      %1272 = vmatpush.msra.mxu0 0.0
      %1273 = vmatpush.msra.mxu0 0.0
      %1274 = vmatpush.msra.mxu0 0.0
      %1275 = vmatpush.msra.mxu0 0.0
      %1276 = vmatpush.msra.mxu0 %v1163
      %1277 = vmatpush.msra.mxu0 %v1162
      %1278 = vmatmul.f32.gmra.mxu0 %v1167
      %v1279 = vpop.f32.mrf.mxu0
      %v1280 = vadd.f32 %v1165, %v1279
      %1281 = vmatmul.f32.gmra.mxu0 %v1170
      %v1282 = vpop.f32.mrf.mxu0
      %v1283 = vadd.f32 %v1165, %v1282
      %1284 = vmatmul.f32.gmra.mxu0 %v1173
      %v1285 = vpop.f32.mrf.mxu0
      %v1286 = vadd.f32 %v1165, %v1285
      %1287 = vmatmul.f32.gmra.mxu0 %v1176
      %v1288 = vpop.f32.mrf.mxu0
      %v1289 = vadd.f32 %v1165, %v1288
      %1290 = vmatmul.f32.gmra.mxu0 %v1179
      %v1291 = vpop.f32.mrf.mxu0
      %v1292 = vadd.f32 %v1165, %v1291
      %1293 = vmatmul.f32.gmra.mxu0 %v1182
      %v1294 = vpop.f32.mrf.mxu0
      %v1295 = vadd.f32 %v1165, %v1294
      %1296 = vmatmul.f32.gmra.mxu0 %v1185
      %v1297 = vpop.f32.mrf.mxu0
      %v1298 = vadd.f32 %v1165, %v1297
      %1299 = vmatmul.f32.gmra.mxu0 %v1188
      %v1300 = vpop.f32.mrf.mxu0
      %v1301 = vadd.f32 %v1165, %v1300
      %1302 = vmatmul.f32.gmra.mxu0 %v1191
      %v1303 = vpop.f32.mrf.mxu0
      %v1304 = vadd.f32 %v1165, %v1303
      %1305 = vmatmul.f32.gmra.mxu0 %v1194
      %v1306 = vpop.f32.mrf.mxu0
      %v1307 = vadd.f32 %v1165, %v1306
      %1308 = vmatmul.f32.gmra.mxu0 %v1197
      %v1309 = vpop.f32.mrf.mxu0
      %v1310 = vadd.f32 %v1165, %v1309
      %1311 = vmatmul.f32.gmra.mxu0 %v1200
      %v1312 = vpop.f32.mrf.mxu0
      %v1313 = vadd.f32 %v1165, %v1312
      %1314 = vmatmul.f32.gmra.mxu0 %v1203
      %v1315 = vpop.f32.mrf.mxu0
      %v1316 = vadd.f32 %v1165, %v1315
      %1317 = vmatmul.f32.gmra.mxu0 %v1206
      %v1318 = vpop.f32.mrf.mxu0
      %v1319 = vadd.f32 %v1165, %v1318
      %1320 = vmatmul.f32.gmra.mxu0 %v1209
      %v1321 = vpop.f32.mrf.mxu0
      %v1322 = vadd.f32 %v1165, %v1321
      %1323 = vmatmul.f32.gmra.mxu0 %v1212
      %v1324 = vpop.f32.mrf.mxu0
      %v1325 = vadd.f32 %v1165, %v1324
      %1326 = vmatmul.f32.gmra.mxu0 %v1215
      %v1327 = vpop.f32.mrf.mxu0
      %v1328 = vadd.f32 %v1165, %v1327
      %1329 = vmatmul.f32.gmra.mxu0 %v1218
      %v1330 = vpop.f32.mrf.mxu0
      %v1331 = vadd.f32 %v1165, %v1330
      %1332 = vmatmul.f32.gmra.mxu0 %v1221
      %v1333 = vpop.f32.mrf.mxu0
      %v1334 = vadd.f32 %v1165, %v1333
      %1335 = vmatmul.f32.gmra.mxu0 %v1224
      %v1336 = vpop.f32.mrf.mxu0
      %v1337 = vadd.f32 %v1165, %v1336
      %1338 = vmatmul.f32.gmra.mxu0 %v1227
      %v1339 = vpop.f32.mrf.mxu0
      %v1340 = vadd.f32 %v1165, %v1339
      %1341 = vmatmul.f32.gmra.mxu0 %v1230
      %v1342 = vpop.f32.mrf.mxu0
      %v1343 = vadd.f32 %v1165, %v1342
      %1344 = vmatmul.f32.gmra.mxu0 %v1233
      %v1345 = vpop.f32.mrf.mxu0
      %v1346 = vadd.f32 %v1165, %v1345
      %1347 = vmatmul.f32.gmra.mxu0 %v1236
      %v1348 = vpop.f32.mrf.mxu0
      %v1349 = vadd.f32 %v1165, %v1348
      %1350 = vmatmul.f32.gmra.mxu0 %v1239
      %v1351 = vpop.f32.mrf.mxu0
      %v1352 = vadd.f32 %v1165, %v1351
      %1353 = vmatmul.f32.gmra.mxu0 %v1242
      %v1354 = vpop.f32.mrf.mxu0
      %v1355 = vadd.f32 %v1165, %v1354
      %1356 = vmatmul.f32.gmra.mxu0 %v1245
      %v1357 = vpop.f32.mrf.mxu0
      %v1358 = vadd.f32 %v1165, %v1357
      %1359 = vmatmul.f32.gmra.mxu0 %v1248
      %v1360 = vpop.f32.mrf.mxu0
      %v1361 = vadd.f32 %v1165, %v1360
      %1362 = vmatmul.f32.gmra.mxu0 %v1251
      %v1363 = vpop.f32.mrf.mxu0
      %v1364 = vadd.f32 %v1165, %v1363
      %1365 = vmatmul.f32.gmra.mxu0 %v1254
      %v1366 = vpop.f32.mrf.mxu0
      %v1367 = vadd.f32 %v1165, %v1366
      %1368 = vmatmul.f32.gmra.mxu0 %v1257
      %v1369 = vpop.f32.mrf.mxu0
      %v1370 = vadd.f32 %v1165, %v1369
      %1371 = vmatmul.f32.gmra.mxu0 %v1260
      %v1372 = vpop.f32.mrf.mxu0
      %v1373 = vadd.f32 %v1165, %v1372
      %1374 = vdwg.mxu0
      %v1375 = vmax.f32 %v1280, 0.0
      %v1376 = vmax.f32 %v1283, 0.0
      %v1377 = vmax.f32 %v1286, 0.0
      %v1378 = vmax.f32 %v1289, 0.0
      %v1379 = vmax.f32 %v1292, 0.0
      %v1380 = vmax.f32 %v1295, 0.0
      %v1381 = vmax.f32 %v1298, 0.0
      %v1382 = vmax.f32 %v1301, 0.0
      %v1383 = vmax.f32 %v1304, 0.0
      %v1384 = vmax.f32 %v1307, 0.0
      %v1385 = vmax.f32 %v1310, 0.0
      %v1386 = vmax.f32 %v1313, 0.0
      %v1387 = vmax.f32 %v1316, 0.0
      %v1388 = vmax.f32 %v1319, 0.0
      %v1389 = vmax.f32 %v1322, 0.0
      %v1390 = vmax.f32 %v1325, 0.0
      %v1391 = vmax.f32 %v1328, 0.0
      %v1392 = vmax.f32 %v1331, 0.0
      %v1393 = vmax.f32 %v1334, 0.0
      %v1394 = vmax.f32 %v1337, 0.0
      %v1395 = vmax.f32 %v1340, 0.0
      %v1396 = vmax.f32 %v1343, 0.0
      %v1397 = vmax.f32 %v1346, 0.0
      %v1398 = vmax.f32 %v1349, 0.0
      %v1399 = vmax.f32 %v1352, 0.0
      %v1400 = vmax.f32 %v1355, 0.0
      %v1401 = vmax.f32 %v1358, 0.0
      %v1402 = vmax.f32 %v1361, 0.0
      %v1403 = vmax.f32 %v1364, 0.0
      %v1404 = vmax.f32 %v1367, 0.0
      %v1405 = vmax.f32 %v1370, 0.0
      %v1406 = vmax.f32 %v1373, 0.0
      %v1407 = vld [vmem:[%s1 + $0xb0] sm:$0xff]
      %v1408 = vld [vmem:[%s1 + $0xb8] sm:$0xff]
      %v1409 = vld [vmem:[%s1 + $0xc0] sm:$0x1]
      %v1410 = vperm.slane %v1409, 0
      %v1412 = vsel %vm672, %v1375, 0
      %v1415 = vsel %vm672, %v1376, 0
      %v1418 = vsel %vm672, %v1377, 0
      %v1421 = vsel %vm672, %v1378, 0
      %v1424 = vsel %vm672, %v1379, 0
      %v1427 = vsel %vm672, %v1380, 0
      %v1430 = vsel %vm672, %v1381, 0
      %v1433 = vsel %vm672, %v1382, 0
      %v1436 = vsel %vm672, %v1383, 0
      %v1439 = vsel %vm672, %v1384, 0
      %v1442 = vsel %vm672, %v1385, 0
      %v1445 = vsel %vm672, %v1386, 0
      %v1448 = vsel %vm672, %v1387, 0
      %v1451 = vsel %vm672, %v1388, 0
      %v1454 = vsel %vm672, %v1389, 0
      %v1457 = vsel %vm672, %v1390, 0
      %v1460 = vsel %vm672, %v1391, 0
      %v1463 = vsel %vm672, %v1392, 0
      %v1466 = vsel %vm672, %v1393, 0
      %v1469 = vsel %vm672, %v1394, 0
      %v1472 = vsel %vm672, %v1395, 0
      %v1475 = vsel %vm672, %v1396, 0
      %v1478 = vsel %vm672, %v1397, 0
      %v1481 = vsel %vm672, %v1398, 0
      %v1484 = vsel %vm672, %v1399, 0
      %v1487 = vsel %vm672, %v1400, 0
      %v1490 = vsel %vm672, %v1401, 0
      %v1493 = vsel %vm672, %v1402, 0
      %v1496 = vsel %vm672, %v1403, 0
      %v1499 = vsel %vm672, %v1404, 0
      %v1502 = vsel %vm672, %v1405, 0
      %v1505 = vsel %vm672, %v1406, 0
      %1507 = vmatpush.msra.mxu0 0.0
      %1508 = vmatpush.msra.mxu0 0.0
      %1509 = vmatpush.msra.mxu0 0.0
      %1510 = vmatpush.msra.mxu0 0.0
      %1511 = vmatpush.msra.mxu0 0.0
      %1512 = vmatpush.msra.mxu0 0.0
      %1513 = vmatpush.msra.mxu0 0.0
      %1514 = vmatpush.msra.mxu0 0.0
      %1515 = vmatpush.msra.mxu0 0.0
      %1516 = vmatpush.msra.mxu0 0.0
      %1517 = vmatpush.msra.mxu0 0.0
      %1518 = vmatpush.msra.mxu0 0.0
      %1519 = vmatpush.msra.mxu0 0.0
      %1520 = vmatpush.msra.mxu0 0.0
      %1521 = vmatpush.msra.mxu0 %v1408
      %1522 = vmatpush.msra.mxu0 %v1407
      %1523 = vmatmul.f32.gmra.mxu0 %v1412
      %v1524 = vpop.f32.mrf.mxu0
      %v1525 = vadd.f32 %v1410, %v1524
      %1526 = vmatmul.f32.gmra.mxu0 %v1415
      %v1527 = vpop.f32.mrf.mxu0
      %v1528 = vadd.f32 %v1410, %v1527
      %1529 = vmatmul.f32.gmra.mxu0 %v1418
      %v1530 = vpop.f32.mrf.mxu0
      %v1531 = vadd.f32 %v1410, %v1530
      %1532 = vmatmul.f32.gmra.mxu0 %v1421
      %v1533 = vpop.f32.mrf.mxu0
      %v1534 = vadd.f32 %v1410, %v1533
      %1535 = vmatmul.f32.gmra.mxu0 %v1424
      %v1536 = vpop.f32.mrf.mxu0
      %v1537 = vadd.f32 %v1410, %v1536
      %1538 = vmatmul.f32.gmra.mxu0 %v1427
      %v1539 = vpop.f32.mrf.mxu0
      %v1540 = vadd.f32 %v1410, %v1539
      %1541 = vmatmul.f32.gmra.mxu0 %v1430
      %v1542 = vpop.f32.mrf.mxu0
      %v1543 = vadd.f32 %v1410, %v1542
      %1544 = vmatmul.f32.gmra.mxu0 %v1433
      %v1545 = vpop.f32.mrf.mxu0
      %v1546 = vadd.f32 %v1410, %v1545
      %1547 = vmatmul.f32.gmra.mxu0 %v1436
      %v1548 = vpop.f32.mrf.mxu0
      %v1549 = vadd.f32 %v1410, %v1548
      %1550 = vmatmul.f32.gmra.mxu0 %v1439
      %v1551 = vpop.f32.mrf.mxu0
      %v1552 = vadd.f32 %v1410, %v1551
      %1553 = vmatmul.f32.gmra.mxu0 %v1442
      %v1554 = vpop.f32.mrf.mxu0
      %v1555 = vadd.f32 %v1410, %v1554
      %1556 = vmatmul.f32.gmra.mxu0 %v1445
      %v1557 = vpop.f32.mrf.mxu0
      %v1558 = vadd.f32 %v1410, %v1557
      %1559 = vmatmul.f32.gmra.mxu0 %v1448
      %v1560 = vpop.f32.mrf.mxu0
      %v1561 = vadd.f32 %v1410, %v1560
      %1562 = vmatmul.f32.gmra.mxu0 %v1451
      %v1563 = vpop.f32.mrf.mxu0
      %v1564 = vadd.f32 %v1410, %v1563
      %1565 = vmatmul.f32.gmra.mxu0 %v1454
      %v1566 = vpop.f32.mrf.mxu0
      %v1567 = vadd.f32 %v1410, %v1566
      %1568 = vmatmul.f32.gmra.mxu0 %v1457
      %v1569 = vpop.f32.mrf.mxu0
      %v1570 = vadd.f32 %v1410, %v1569
      %1571 = vmatmul.f32.gmra.mxu0 %v1460
      %v1572 = vpop.f32.mrf.mxu0
      %v1573 = vadd.f32 %v1410, %v1572
      %1574 = vmatmul.f32.gmra.mxu0 %v1463
      %v1575 = vpop.f32.mrf.mxu0
      %v1576 = vadd.f32 %v1410, %v1575
      %1577 = vmatmul.f32.gmra.mxu0 %v1466
      %v1578 = vpop.f32.mrf.mxu0
      %v1579 = vadd.f32 %v1410, %v1578
      %1580 = vmatmul.f32.gmra.mxu0 %v1469
      %v1581 = vpop.f32.mrf.mxu0
      %v1582 = vadd.f32 %v1410, %v1581
      %1583 = vmatmul.f32.gmra.mxu0 %v1472
      %v1584 = vpop.f32.mrf.mxu0
      %v1585 = vadd.f32 %v1410, %v1584
      %1586 = vmatmul.f32.gmra.mxu0 %v1475
      %v1587 = vpop.f32.mrf.mxu0
      %v1588 = vadd.f32 %v1410, %v1587
      %1589 = vmatmul.f32.gmra.mxu0 %v1478
      %v1590 = vpop.f32.mrf.mxu0
      %v1591 = vadd.f32 %v1410, %v1590
      %1592 = vmatmul.f32.gmra.mxu0 %v1481
      %v1593 = vpop.f32.mrf.mxu0
      %v1594 = vadd.f32 %v1410, %v1593
      %1595 = vmatmul.f32.gmra.mxu0 %v1484
      %v1596 = vpop.f32.mrf.mxu0
      %v1597 = vadd.f32 %v1410, %v1596
      %1598 = vmatmul.f32.gmra.mxu0 %v1487
      %v1599 = vpop.f32.mrf.mxu0
      %v1600 = vadd.f32 %v1410, %v1599
      %1601 = vmatmul.f32.gmra.mxu0 %v1490
      %v1602 = vpop.f32.mrf.mxu0
      %v1603 = vadd.f32 %v1410, %v1602
      %1604 = vmatmul.f32.gmra.mxu0 %v1493
      %v1605 = vpop.f32.mrf.mxu0
      %v1606 = vadd.f32 %v1410, %v1605
      %1607 = vmatmul.f32.gmra.mxu0 %v1496
      %v1608 = vpop.f32.mrf.mxu0
      %v1609 = vadd.f32 %v1410, %v1608
      %1610 = vmatmul.f32.gmra.mxu0 %v1499
      %v1611 = vpop.f32.mrf.mxu0
      %v1612 = vadd.f32 %v1410, %v1611
      %1613 = vmatmul.f32.gmra.mxu0 %v1502
      %v1614 = vpop.f32.mrf.mxu0
      %v1615 = vadd.f32 %v1410, %v1614
      %1616 = vmatmul.f32.gmra.mxu0 %v1505
      %v1617 = vpop.f32.mrf.mxu0
      %v1618 = vadd.f32 %v1410, %v1617
      %1619 = vdwg.mxu0
      %v1620 = vmax.f32 %v1525, 0.0
      %v1621 = vmax.f32 %v1528, 0.0
      %v1622 = vmax.f32 %v1531, 0.0
      %v1623 = vmax.f32 %v1534, 0.0
      %v1624 = vmax.f32 %v1537, 0.0
      %v1625 = vmax.f32 %v1540, 0.0
      %v1626 = vmax.f32 %v1543, 0.0
      %v1627 = vmax.f32 %v1546, 0.0
      %v1628 = vmax.f32 %v1549, 0.0
      %v1629 = vmax.f32 %v1552, 0.0
      %v1630 = vmax.f32 %v1555, 0.0
      %v1631 = vmax.f32 %v1558, 0.0
      %v1632 = vmax.f32 %v1561, 0.0
      %v1633 = vmax.f32 %v1564, 0.0
      %v1634 = vmax.f32 %v1567, 0.0
      %v1635 = vmax.f32 %v1570, 0.0
      %v1636 = vmax.f32 %v1573, 0.0
      %v1637 = vmax.f32 %v1576, 0.0
      %v1638 = vmax.f32 %v1579, 0.0
      %v1639 = vmax.f32 %v1582, 0.0
      %v1640 = vmax.f32 %v1585, 0.0
      %v1641 = vmax.f32 %v1588, 0.0
      %v1642 = vmax.f32 %v1591, 0.0
      %v1643 = vmax.f32 %v1594, 0.0
      %v1644 = vmax.f32 %v1597, 0.0
      %v1645 = vmax.f32 %v1600, 0.0
      %v1646 = vmax.f32 %v1603, 0.0
      %v1647 = vmax.f32 %v1606, 0.0
      %v1648 = vmax.f32 %v1609, 0.0
      %v1649 = vmax.f32 %v1612, 0.0
      %v1650 = vmax.f32 %v1615, 0.0
      %v1651 = vmax.f32 %v1618, 0.0
      %vm1652 = vcmask 31744
      %1653 = vst.msk [vmem:[%s145] sm:$0xff] %vm1652, %v1620
      %1654 = vst.msk [vmem:[%s145 + $0x8] sm:$0xff] %vm1652, %v1621
      %1655 = vst.msk [vmem:[%s145 + $0x10] sm:$0xff] %vm1652, %v1622
      %1656 = vst.msk [vmem:[%s145 + $0x18] sm:$0xff] %vm1652, %v1623
      %1657 = vst.msk [vmem:[%s145 + $0x20] sm:$0xff] %vm1652, %v1624
      %1658 = vst.msk [vmem:[%s145 + $0x28] sm:$0xff] %vm1652, %v1625
      %1659 = vst.msk [vmem:[%s145 + $0x30] sm:$0xff] %vm1652, %v1626
      %1660 = vst.msk [vmem:[%s145 + $0x38] sm:$0xff] %vm1652, %v1627
      %1661 = vst.msk [vmem:[%s145 + $0x40] sm:$0xff] %vm1652, %v1628
      %1662 = vst.msk [vmem:[%s145 + $0x48] sm:$0xff] %vm1652, %v1629
      %1663 = vst.msk [vmem:[%s145 + $0x50] sm:$0xff] %vm1652, %v1630
      %1664 = vst.msk [vmem:[%s145 + $0x58] sm:$0xff] %vm1652, %v1631
      %1665 = vst.msk [vmem:[%s145 + $0x60] sm:$0xff] %vm1652, %v1632
      %1666 = vst.msk [vmem:[%s145 + $0x68] sm:$0xff] %vm1652, %v1633
      %1667 = vst.msk [vmem:[%s145 + $0x70] sm:$0xff] %vm1652, %v1634
      %1668 = vst.msk [vmem:[%s145 + $0x78] sm:$0xff] %vm1652, %v1635
      %1669 = vst.msk [vmem:[%s145 + $0x80] sm:$0xff] %vm1652, %v1636
      %1670 = vst.msk [vmem:[%s145 + $0x88] sm:$0xff] %vm1652, %v1637
      %1671 = vst.msk [vmem:[%s145 + $0x90] sm:$0xff] %vm1652, %v1638
      %1672 = vst.msk [vmem:[%s145 + $0x98] sm:$0xff] %vm1652, %v1639
      %1673 = vst.msk [vmem:[%s145 + $0xa0] sm:$0xff] %vm1652, %v1640
      %1674 = vst.msk [vmem:[%s145 + $0xa8] sm:$0xff] %vm1652, %v1641
      %1675 = vst.msk [vmem:[%s145 + $0xb0] sm:$0xff] %vm1652, %v1642
      %1676 = vst.msk [vmem:[%s145 + $0xb8] sm:$0xff] %vm1652, %v1643
      %1677 = vst.msk [vmem:[%s145 + $0xc0] sm:$0xff] %vm1652, %v1644
      %1678 = vst.msk [vmem:[%s145 + $0xc8] sm:$0xff] %vm1652, %v1645
      %1679 = vst.msk [vmem:[%s145 + $0xd0] sm:$0xff] %vm1652, %v1646
      %1680 = vst.msk [vmem:[%s145 + $0xd8] sm:$0xff] %vm1652, %v1647
      %1681 = vst.msk [vmem:[%s145 + $0xe0] sm:$0xff] %vm1652, %v1648
      %1682 = vst.msk [vmem:[%s145 + $0xe8] sm:$0xff] %vm1652, %v1649
      %1683 = vst.msk [vmem:[%s145 + $0xf0] sm:$0xff] %vm1652, %v1650
      %1684 = vst.msk [vmem:[%s145 + $0xf8] sm:$0xff] %vm1652, %v1651
      %s1685 = smul.u32 32, %s13
      %p1686 = scmp.lt.s32.totalorder %s1685, 63
      %s1687 = scalar_select %p1686, %s1685, 63
      %s1688 = smul.addr %s1687, 8
      %s1689 = scalar_lea.vmem %s2, %s1688
      // Predicated region
      $region29: #{tpu_custom_call.1} parent=27 // pred_check
        %p1690 = pneg %p78
      $region30: #{tpu_custom_call.1} parent=27 // pred_check_branch
        %1692 = sbr.rel (%p1690) target = $region32
      $region31: #{tpu_custom_call.1} parent=27 // pred_region
        %s1693 = smul.u32 32, %s13
      $region32: #{tpu_custom_call.1} parent=27 // pred_fallthru
        _
    $region28: #{tpu_custom_call.1} parent=5 // pred_fallthru
      _
    %p1694 = scmp.le.s32.totalorder 2, %s8
    // Predicated region
    $region33: #{tpu_custom_call.1} parent=5 // pred_check
      %p1695 = pneg %p1694
    $region34: #{tpu_custom_call.1} parent=5 // pred_check_branch
      %1697 = sbr.rel (%p1695) target = $region36
    $region35: #{tpu_custom_call.1} parent=5 // pred_region
      %s1698 = ssub.s32 %s8, 2
      // Predicated region
      $region37: #{tpu_custom_call.1} parent=35 // pred_check
        %p1699 = pneg %p84
      $region38: #{tpu_custom_call.1} parent=35 // pred_check_branch
        %1701 = sbr.rel (%p1699) target = $region40
      $region39: #{tpu_custom_call.1} parent=35 // pred_region
        %s1702 = smul.u32 32, %s14
        %p1703 = scmp.lt.s32.totalorder %s1702, 63
        %s1704 = scalar_select %p1703, %s1702, 63
        %s1705 = smul.addr %s1704, 8
        %s1706 = scalar_lea.vmem %s2, %s1705
      $region40: #{tpu_custom_call.1} parent=35 // pred_fallthru
        _
    $region36: #{tpu_custom_call.1} parent=5 // pred_fallthru
      _
  $region6: #{tpu_custom_call.1} parent=0 // loop_footer
    %s12 = sadd.s32 1, %s8
  $region7: #{tpu_custom_call.1} parent=0 // loop_footer_branch
    %7 = sbr.rel target = $region3
  $region8: #{tpu_custom_call.1} parent=0 // loop_exit
    _

</llo_original>
